<compile_context>
chip_gen: v6e
topology: v6e:2x2x1
jax: 0.10.0
libtpu: 0.0.40
codegen_flags: <defaults>
</compile_context>

<pallas_src>
import functools

import jax
import jax.numpy as jnp
from jax.experimental import pallas as pl
from jax.experimental.pallas import tpu as pltpu


def dqn_kernel(x_ref, w1_ref, b1_ref, w2_ref, b2_ref, w3_ref, b3_ref, out_ref):
    # x_ref is one (TB, input_size) batch tile; weights/biases are full arrays
    # kept resident in VMEM (constant block index across the batch grid).
    x = x_ref[...]

    # fc1 + ReLU  (MXU matmul, f32 accumulation; ReLU on the VPU)
    h1 = jnp.dot(x, w1_ref[...], preferred_element_type=jnp.float32) + b1_ref[...]
    h1 = jnp.maximum(h1, 0.0)

    # fc2 + ReLU
    h2 = jnp.dot(h1, w2_ref[...], preferred_element_type=jnp.float32) + b2_ref[...]
    h2 = jnp.maximum(h2, 0.0)

    # fc3 (no activation) — out_ref is 128-lane padded, so this is an unmasked,
    # lane-dense store.
    out = jnp.dot(h2, w3_ref[...], preferred_element_type=jnp.float32) + b3_ref[...]
    out_ref[...] = out.astype(out_ref.dtype)


def _round_up(n, m):
    return ((n + m - 1) // m) * m


@functools.partial(jax.jit, static_argnames=("tb",))
def dqn_forward(x, params, *, tb=256):
    """Run the DQN forward pass in a single Pallas kernel.

    x: [B, input_size] float32
    params: dict with w1 [in,64], b1 [1,64], w2 [64,64], b2 [1,64],
            w3 [64,out], b3 [1,out]   (weights already transposed to (in, out))
    tb: batch tile (rows per grid step). Large batches are split into TB-row
        tiles; small batches use a single sublane-aligned tile.
    returns: [B, output_size] float32
    """
    B, in_size = x.shape
    hidden = params["w1"].shape[1]
    out_size = params["w3"].shape[1]

    # --- Lane-dense output padding (multiple of 128 lanes). -------------------
    out_pad = max(128, _round_up(out_size, 128))
    w3p = jnp.zeros((hidden, out_pad), jnp.float32).at[:, :out_size].set(params["w3"])
    b3p = jnp.zeros((1, out_pad), jnp.float32).at[:, :out_size].set(params["b3"])

    # --- Batch tiling: sublane-aligned tile, batch padded to a tile multiple. -
    tb_eff = min(tb, max(8, _round_up(B, 8)))
    bp = _round_up(B, tb_eff)
    xp = x if bp == B else jnp.pad(x, ((0, bp - B), (0, 0)))

    grid = (bp // tb_eff,)

    # Weights/biases: constant block index -> fetched once, resident in VMEM.
    resident = lambda a: pl.BlockSpec(a.shape, lambda i: (0, 0))

    out = pl.pallas_call(
        dqn_kernel,
        out_shape=jax.ShapeDtypeStruct((bp, out_pad), jnp.float32),
        grid=grid,
        in_specs=[
            pl.BlockSpec((tb_eff, in_size), lambda i: (i, 0)),   # x tile streams
            resident(params["w1"]), resident(params["b1"]),
            resident(params["w2"]), resident(params["b2"]),
            resident(w3p), resident(b3p),
        ],
        out_specs=pl.BlockSpec((tb_eff, out_pad), lambda i: (i, 0)),
        compiler_params=pltpu.CompilerParams(
            dimension_semantics=("parallel",),                   # megacore on v7x
        ),
    )(xp, params["w1"], params["b1"], params["w2"], params["b2"], w3p, b3p)

    # Strip batch padding and the lane padding of the final layer.
    return out[:B, :out_size]


def init_params(key, input_size, output_size, hidden=64):
    """Deterministic synthetic init matching nn.Linear shapes.

    PyTorch nn.Linear(in, out) has weight [out, in] and bias [out].
    We store the transpose [in, out] for the kernel, and bias as [1, out].
    """
    ks = jax.random.split(key, 6)

    def lin(kw, kb, fan_in, fan_out):
        bound = 1.0 / jnp.sqrt(fan_in)
        w = jax.random.uniform(kw, (fan_in, fan_out), jnp.float32, -bound, bound)
        b = jax.random.uniform(kb, (1, fan_out), jnp.float32, -bound, bound)
        return w, b

    w1, b1 = lin(ks[0], ks[1], input_size, hidden)
    w2, b2 = lin(ks[2], ks[3], hidden, hidden)
    w3, b3 = lin(ks[4], ks[5], hidden, output_size)
    return {"w1": w1, "b1": b1, "w2": w2, "b2": b2, "w3": w3, "b3": b3}


def dqn_reference(x, p):
    h1 = jnp.maximum(x @ p["w1"] + p["b1"], 0.0)
    h2 = jnp.maximum(h1 @ p["w2"] + p["b2"], 0.0)
    return h2 @ p["w3"] + p["b3"]


if __name__ == "__main__":
    key = jax.random.PRNGKey(0)
    k_x, k_p, k_x2 = jax.random.split(key, 3)

    input_size = 16     # e.g. a Nim state encoding
    output_size = 8     # e.g. number of possible moves
    params = init_params(k_p, input_size, output_size)

    # Small-batch inference path (single tile, padded to 8 sublanes).
    batch = 4
    x = jax.random.normal(k_x, (batch, input_size), dtype=jnp.float32)
    out = jax.block_until_ready(dqn_forward(x, params))
    ref = dqn_reference(x, params)
    assert out.shape == (batch, output_size)
    assert jnp.allclose(out, ref, atol=1e-5, rtol=1e-5)

    # Multi-tile path (exercises the batch grid + batch padding: grid=(3,)).
    batch2 = 300
    x2 = jax.random.normal(k_x2, (batch2, input_size), dtype=jnp.float32)
    out2 = jax.block_until_ready(dqn_forward(x2, params, tb=128))
    ref2 = dqn_reference(x2, params)
    assert out2.shape == (batch2, output_size)
    assert jnp.allclose(out2, ref2, atol=1e-5, rtol=1e-5)

    print("KERNEL_OK")
</pallas_src>

<mosaic_0001>
module attributes {stable_mosaic.version = 11 : i64} {
  func.func @dqn_kernel(%arg0: i32, %arg1: memref<8x16xf32, #tpu.memory_space<vmem>>, %arg2: memref<16x64xf32, #tpu.memory_space<vmem>>, %arg3: memref<1x64xf32, #tpu.memory_space<vmem>>, %arg4: memref<64x64xf32, #tpu.memory_space<vmem>>, %arg5: memref<1x64xf32, #tpu.memory_space<vmem>>, %arg6: memref<64x128xf32, #tpu.memory_space<vmem>>, %arg7: memref<1x128xf32, #tpu.memory_space<vmem>>, %arg8: memref<8x128xf32, #tpu.memory_space<vmem>>) attributes {dimension_semantics = [#tpu.dimension_semantics<parallel>], iteration_bounds = array<i64: 1>, scalar_prefetch = 0 : i64, scratch_operands = 0 : i64, tpu.core_type = #tpu.core_type<tc>, window_params = [{transform_indices = @transform_0, window_bounds = array<i64: 8, 16>}, {pipeline_mode = #tpu.pipeline_mode<synchronous>, transform_indices = @transform_1, window_bounds = array<i64: 16, 64>}, {pipeline_mode = #tpu.pipeline_mode<synchronous>, transform_indices = @transform_2, window_bounds = array<i64: 1, 64>}, {pipeline_mode = #tpu.pipeline_mode<synchronous>, transform_indices = @transform_3, window_bounds = array<i64: 64, 64>}, {pipeline_mode = #tpu.pipeline_mode<synchronous>, transform_indices = @transform_4, window_bounds = array<i64: 1, 64>}, {pipeline_mode = #tpu.pipeline_mode<synchronous>, transform_indices = @transform_5, window_bounds = array<i64: 64, 128>}, {pipeline_mode = #tpu.pipeline_mode<synchronous>, transform_indices = @transform_6, window_bounds = array<i64: 1, 128>}, {transform_indices = @transform_7, window_bounds = array<i64: 8, 128>}]} {
    %c0 = arith.constant 0 : index
    %c0_0 = arith.constant 0 : index
    %0 = vector.load %arg1[%c0, %c0_0] : memref<8x16xf32, #tpu.memory_space<vmem>>, vector<8x16xf32>
    %c0_1 = arith.constant 0 : index
    %c0_2 = arith.constant 0 : index
    %1 = vector.load %arg2[%c0_1, %c0_2] : memref<16x64xf32, #tpu.memory_space<vmem>>, vector<16x64xf32>
    %cst = arith.constant dense<0.000000e+00> : vector<8x64xf32>
    %2 = tpu.matmul %0, %1, %cst {dimension_numbers = #tpu.dot_dimension_numbers<[1], [0], [0], [1], [0, 0, 1, 1], [], []>} : vector<8x16xf32>, vector<16x64xf32>, vector<8x64xf32> -> vector<8x64xf32>
    %c0_3 = arith.constant 0 : index
    %c0_4 = arith.constant 0 : index
    %3 = vector.load %arg3[%c0_3, %c0_4] : memref<1x64xf32, #tpu.memory_space<vmem>>, vector<1x64xf32>
    %4 = vector.broadcast %3 : vector<1x64xf32> to vector<8x64xf32>
    %5 = arith.addf %2, %4 : vector<8x64xf32>
    %cst_5 = arith.constant 0.000000e+00 : f32
    %6 = vector.broadcast %cst_5 : f32 to vector<8x64xf32>
    %7 = arith.maximumf %5, %6 : vector<8x64xf32>
    %c0_6 = arith.constant 0 : index
    %c0_7 = arith.constant 0 : index
    %8 = vector.load %arg4[%c0_6, %c0_7] : memref<64x64xf32, #tpu.memory_space<vmem>>, vector<64x64xf32>
    %cst_8 = arith.constant dense<0.000000e+00> : vector<8x64xf32>
    %9 = tpu.matmul %7, %8, %cst_8 {dimension_numbers = #tpu.dot_dimension_numbers<[1], [0], [0], [1], [0, 0, 1, 1], [], []>} : vector<8x64xf32>, vector<64x64xf32>, vector<8x64xf32> -> vector<8x64xf32>
    %c0_9 = arith.constant 0 : index
    %c0_10 = arith.constant 0 : index
    %10 = vector.load %arg5[%c0_9, %c0_10] : memref<1x64xf32, #tpu.memory_space<vmem>>, vector<1x64xf32>
    %11 = vector.broadcast %10 : vector<1x64xf32> to vector<8x64xf32>
    %12 = arith.addf %9, %11 : vector<8x64xf32>
    %cst_11 = arith.constant 0.000000e+00 : f32
    %13 = vector.broadcast %cst_11 : f32 to vector<8x64xf32>
    %14 = arith.maximumf %12, %13 : vector<8x64xf32>
    %c0_12 = arith.constant 0 : index
    %c0_13 = arith.constant 0 : index
    %15 = vector.load %arg6[%c0_12, %c0_13] : memref<64x128xf32, #tpu.memory_space<vmem>>, vector<64x128xf32>
    %cst_14 = arith.constant dense<0.000000e+00> : vector<8x128xf32>
    %16 = tpu.matmul %14, %15, %cst_14 {dimension_numbers = #tpu.dot_dimension_numbers<[1], [0], [0], [1], [0, 0, 1, 1], [], []>} : vector<8x64xf32>, vector<64x128xf32>, vector<8x128xf32> -> vector<8x128xf32>
    %c0_15 = arith.constant 0 : index
    %c0_16 = arith.constant 0 : index
    %17 = vector.load %arg7[%c0_15, %c0_16] : memref<1x128xf32, #tpu.memory_space<vmem>>, vector<1x128xf32>
    %18 = vector.broadcast %17 : vector<1x128xf32> to vector<8x128xf32>
    %19 = arith.addf %16, %18 : vector<8x128xf32>
    %c0_17 = arith.constant 0 : index
    %c0_18 = arith.constant 0 : index
    %20 = vector.load %arg8[%c0_17, %c0_18] : memref<8x128xf32, #tpu.memory_space<vmem>>, vector<8x128xf32>
    tpu.vector_store %arg8[%c0_17, %c0_18], %19 {strides = array<i32>} : memref<8x128xf32, #tpu.memory_space<vmem>>, vector<8x128xf32>,
    return
  }
  func.func @transform_0(%arg0: i32) -> (i32, i32) {
    %c0_i32 = arith.constant 0 : i32
    %c0_i32_0 = arith.constant 0 : i32
    return %arg0, %c0_i32 : i32, i32
  }
  func.func @transform_1(%arg0: i32) -> (i32, i32) {
    %c0_i32 = arith.constant 0 : i32
    %c0_i32_0 = arith.constant 0 : i32
    %c0_i32_1 = arith.constant 0 : i32
    return %c0_i32, %c0_i32_0 : i32, i32
  }
  func.func @transform_2(%arg0: i32) -> (i32, i32) {
    %c0_i32 = arith.constant 0 : i32
    %c0_i32_0 = arith.constant 0 : i32
    %c0_i32_1 = arith.constant 0 : i32
    return %c0_i32, %c0_i32_0 : i32, i32
  }
  func.func @transform_3(%arg0: i32) -> (i32, i32) {
    %c0_i32 = arith.constant 0 : i32
    %c0_i32_0 = arith.constant 0 : i32
    %c0_i32_1 = arith.constant 0 : i32
    return %c0_i32, %c0_i32_0 : i32, i32
  }
  func.func @transform_4(%arg0: i32) -> (i32, i32) {
    %c0_i32 = arith.constant 0 : i32
    %c0_i32_0 = arith.constant 0 : i32
    %c0_i32_1 = arith.constant 0 : i32
    return %c0_i32, %c0_i32_0 : i32, i32
  }
  func.func @transform_5(%arg0: i32) -> (i32, i32) {
    %c0_i32 = arith.constant 0 : i32
    %c0_i32_0 = arith.constant 0 : i32
    %c0_i32_1 = arith.constant 0 : i32
    return %c0_i32, %c0_i32_0 : i32, i32
  }
  func.func @transform_6(%arg0: i32) -> (i32, i32) {
    %c0_i32 = arith.constant 0 : i32
    %c0_i32_0 = arith.constant 0 : i32
    %c0_i32_1 = arith.constant 0 : i32
    return %c0_i32, %c0_i32_0 : i32, i32
  }
  func.func @transform_7(%arg0: i32) -> (i32, i32) {
    %c0_i32 = arith.constant 0 : i32
    %c0_i32_0 = arith.constant 0 : i32
    return %arg0, %c0_i32 : i32, i32
  }
}

</mosaic_0001>

<llo_original>
// kernel: dqn_forward.1
$region0: #{dqn_forward.1}
  #allocation0 [shape = 'u32[]', space=smem, size = 0x4, offset = 0x4, fixed_abs, tag = 'smem constant byte address 0x4 - core index']
  #allocation1 [shape = 'u32[144,128]{1,0:T(1,128)}', space=vmem, size = 0x12000, scoped, tag = 'internal scratch']
  %s0 = inlined_call_operand.vmem [shape: f32[8,16], index: 0, kind: input, shape index: {}]
  %s1 = inlined_call_operand.vmem [shape: f32[16,64], index: 1, kind: input, shape index: {}]
  %s2 = inlined_call_operand.vmem [shape: f32[1,64], index: 2, kind: input, shape index: {}]
  %s3 = inlined_call_operand.vmem [shape: f32[64,64], index: 3, kind: input, shape index: {}]
  %s4 = inlined_call_operand.vmem [shape: f32[1,64], index: 4, kind: input, shape index: {}]
  %s5 = inlined_call_operand.vmem [shape: f32[64,128], index: 5, kind: input, shape index: {}]
  %s6 = inlined_call_operand.vmem [shape: f32[1,128], index: 6, kind: input, shape index: {}]
  %s7 = inlined_call_operand.vmem [shape: f32[8,128], index: 7, kind: output, shape index: {}]
  %s8 = sld [smem:[#allocation0]]
  $region38: #{dqn_forward.1} parent=0
    _
  %s10 = ssub.s32 1, %s8
  %s11 = scalar_select 0, %s10, %s8
  // Predicated region
  $region2: #{dqn_forward.1} parent=0 // pred_check
    _
  $region3: #{dqn_forward.1} parent=0 // pred_check_branch
    %13 = sbr.rel (0) target = $region5
  $region4: #{dqn_forward.1} parent=0 // pred_region
    _
  $region5: #{dqn_forward.1} parent=0 // pred_fallthru
    _
  // Predicated region
  $region6: #{dqn_forward.1} parent=0 // pred_check
    _
  $region7: #{dqn_forward.1} parent=0 // pred_check_branch
    %15 = sbr.rel (0) target = $region9
  $region8: #{dqn_forward.1} parent=0 // pred_region
    _
  $region9: #{dqn_forward.1} parent=0 // pred_fallthru
    _
  // Predicated region
  $region10: #{dqn_forward.1} parent=0 // pred_check
    _
  $region11: #{dqn_forward.1} parent=0 // pred_check_branch
    %17 = sbr.rel (0) target = $region13
  $region12: #{dqn_forward.1} parent=0 // pred_region
    _
  $region13: #{dqn_forward.1} parent=0 // pred_fallthru
    _
  // Predicated region
  $region14: #{dqn_forward.1} parent=0 // pred_check
    _
  $region15: #{dqn_forward.1} parent=0 // pred_check_branch
    %19 = sbr.rel (0) target = $region17
  $region16: #{dqn_forward.1} parent=0 // pred_region
    _
  $region17: #{dqn_forward.1} parent=0 // pred_fallthru
    _
  // Predicated region
  $region18: #{dqn_forward.1} parent=0 // pred_check
    _
  $region19: #{dqn_forward.1} parent=0 // pred_check_branch
    %21 = sbr.rel (0) target = $region21
  $region20: #{dqn_forward.1} parent=0 // pred_region
    _
  $region21: #{dqn_forward.1} parent=0 // pred_fallthru
    _
  // Predicated region
  $region22: #{dqn_forward.1} parent=0 // pred_check
    _
  $region23: #{dqn_forward.1} parent=0 // pred_check_branch
    %23 = sbr.rel (0) target = $region25
  $region24: #{dqn_forward.1} parent=0 // pred_region
    _
  $region25: #{dqn_forward.1} parent=0 // pred_fallthru
    _
  // Predicated region
  $region26: #{dqn_forward.1} parent=0 // pred_check
    _
  $region27: #{dqn_forward.1} parent=0 // pred_check_branch
    %25 = sbr.rel (0) target = $region29
  $region28: #{dqn_forward.1} parent=0 // pred_region
    _
  $region29: #{dqn_forward.1} parent=0 // pred_fallthru
    _
  %v26 = vld [vmem:[%s0] sm:$0xff]
  %v27 = vld [vmem:[%s1] sm:$0xff]
  %v28 = vld [vmem:[%s1 + $0x8] sm:$0xff]
  %v29 = vld [vmem:[%s2] sm:$0x1]
  %v31 = vlaneseq
  %v32 = vshrl.u32 %v31, 7
  %v33 = vsub.s32 0, %v32
  %v34 = vrot.slane %v29, %v33
  %vm36 = vcmask 130048
  %v38 = vsel %vm36, %v26, 0
  %40 = vmatprep.subr.mxu0 0.0
  %41 = vmatpush1.msra.mxu0 0.0
  %42 = vmatprep.subr.mxu0 0.0
  %43 = vmatpush1.msra.mxu0 0.0
  %44 = vmatprep.subr.mxu0 0.0
  %45 = vmatpush1.msra.mxu0 0.0
  %46 = vmatprep.subr.mxu0 0.0
  %47 = vmatpush1.msra.mxu0 0.0
  %48 = vmatprep.subr.mxu0 0.0
  %49 = vmatpush1.msra.mxu0 0.0
  %50 = vmatprep.subr.mxu0 0.0
  %51 = vmatpush1.msra.mxu0 0.0
  %52 = vmatprep.subr.mxu0 0.0
  %53 = vmatpush1.msra.mxu0 0.0
  %54 = vmatprep.subr.mxu0 0.0
  %55 = vmatpush1.msra.mxu0 0.0
  %56 = vmatprep.subr.mxu0 0.0
  %57 = vmatpush1.msra.mxu0 0.0
  %58 = vmatprep.subr.mxu0 0.0
  %59 = vmatpush1.msra.mxu0 0.0
  %60 = vmatprep.subr.mxu0 0.0
  %61 = vmatpush1.msra.mxu0 0.0
  %62 = vmatprep.subr.mxu0 0.0
  %63 = vmatpush1.msra.mxu0 0.0
  %64 = vmatprep.subr.mxu0 0.0
  %65 = vmatpush1.msra.mxu0 0.0
  %66 = vmatprep.subr.mxu0 0.0
  %67 = vmatpush1.msra.mxu0 0.0
  %68 = vmatprep.subr.mxu0 0.0
  %69 = vmatpush1.msra.mxu0 %v28
  %70 = vmatprep.subr.mxu0 0.0
  %71 = vmatpush1.msra.mxu0 %v27
  %72 = vmatprep.subr.mxu0 0.0
  %73 = vmatpush2.msra.mxu0 0.0
  %74 = vmatprep.subr.mxu0 0.0
  %75 = vmatpush2.msra.mxu0 0.0
  %76 = vmatprep.subr.mxu0 0.0
  %77 = vmatpush2.msra.mxu0 0.0
  %78 = vmatprep.subr.mxu0 0.0
  %79 = vmatpush2.msra.mxu0 0.0
  %80 = vmatprep.subr.mxu0 0.0
  %81 = vmatpush2.msra.mxu0 0.0
  %82 = vmatprep.subr.mxu0 0.0
  %83 = vmatpush2.msra.mxu0 0.0
  %84 = vmatprep.subr.mxu0 0.0
  %85 = vmatpush2.msra.mxu0 0.0
  %86 = vmatprep.subr.mxu0 0.0
  %87 = vmatpush2.msra.mxu0 0.0
  %88 = vmatprep.subr.mxu0 0.0
  %89 = vmatpush2.msra.mxu0 0.0
  %90 = vmatprep.subr.mxu0 0.0
  %91 = vmatpush2.msra.mxu0 0.0
  %92 = vmatprep.subr.mxu0 0.0
  %93 = vmatpush2.msra.mxu0 0.0
  %94 = vmatprep.subr.mxu0 0.0
  %95 = vmatpush2.msra.mxu0 0.0
  %96 = vmatprep.subr.mxu0 0.0
  %97 = vmatpush2.msra.mxu0 0.0
  %98 = vmatprep.subr.mxu0 0.0
  %99 = vmatpush2.msra.mxu0 0.0
  %100 = vmatprep.subr.mxu0 0.0
  %101 = vmatpush2.msra.mxu0 0.0
  %102 = vmatprep.subr.mxu0 0.0
  %103 = vmatpush2.msra.mxu0 0.0
  %104 = vmatprep.mubr.f32.mxu0 0.0
  %105 = vmatmul.mubr.f32.gmra.mxu0 %v38
  %v106 = vpop.f32.mrf.mxu0
  %v107 = vadd.f32 %v34, %v106
  %v108 = vpop.f32.mrf.mxu0
  %109 = vdwg.mxu0
  %v110 = vmax.f32 %v107, 0.0
  %v111 = vld [vmem:[%s3] sm:$0xff]
  %v112 = vld [vmem:[%s3 + $0x8] sm:$0xff]
  %v113 = vld [vmem:[%s3 + $0x10] sm:$0xff]
  %v114 = vld [vmem:[%s3 + $0x18] sm:$0xff]
  %v115 = vld [vmem:[%s3 + $0x20] sm:$0xff]
  %v116 = vld [vmem:[%s3 + $0x28] sm:$0xff]
  %v117 = vld [vmem:[%s3 + $0x30] sm:$0xff]
  %v118 = vld [vmem:[%s3 + $0x38] sm:$0xff]
  %v119 = vld [vmem:[%s4] sm:$0x1]
  %v121 = vlaneseq
  %v122 = vshrl.u32 %v121, 7
  %v123 = vsub.s32 0, %v122
  %v124 = vrot.slane %v119, %v123
  %vm126 = vcmask 523264
  %v128 = vsel %vm126, %v110, 0
  %130 = vmatprep.subr.mxu0 0.0
  %131 = vmatpush1.msra.mxu0 0.0
  %132 = vmatprep.subr.mxu0 0.0
  %133 = vmatpush1.msra.mxu0 0.0
  %134 = vmatprep.subr.mxu0 0.0
  %135 = vmatpush1.msra.mxu0 0.0
  %136 = vmatprep.subr.mxu0 0.0
  %137 = vmatpush1.msra.mxu0 0.0
  %138 = vmatprep.subr.mxu0 0.0
  %139 = vmatpush1.msra.mxu0 0.0
  %140 = vmatprep.subr.mxu0 0.0
  %141 = vmatpush1.msra.mxu0 0.0
  %142 = vmatprep.subr.mxu0 0.0
  %143 = vmatpush1.msra.mxu0 0.0
  %144 = vmatprep.subr.mxu0 0.0
  %145 = vmatpush1.msra.mxu0 0.0
  %146 = vmatprep.subr.mxu0 0.0
  %147 = vmatpush1.msra.mxu0 %v118
  %148 = vmatprep.subr.mxu0 0.0
  %149 = vmatpush1.msra.mxu0 %v117
  %150 = vmatprep.subr.mxu0 0.0
  %151 = vmatpush1.msra.mxu0 %v116
  %152 = vmatprep.subr.mxu0 0.0
  %153 = vmatpush1.msra.mxu0 %v115
  %154 = vmatprep.subr.mxu0 0.0
  %155 = vmatpush1.msra.mxu0 %v114
  %156 = vmatprep.subr.mxu0 0.0
  %157 = vmatpush1.msra.mxu0 %v113
  %158 = vmatprep.subr.mxu0 0.0
  %159 = vmatpush1.msra.mxu0 %v112
  %160 = vmatprep.subr.mxu0 0.0
  %161 = vmatpush1.msra.mxu0 %v111
  %162 = vmatprep.subr.mxu0 0.0
  %163 = vmatpush2.msra.mxu0 0.0
  %164 = vmatprep.subr.mxu0 0.0
  %165 = vmatpush2.msra.mxu0 0.0
  %166 = vmatprep.subr.mxu0 0.0
  %167 = vmatpush2.msra.mxu0 0.0
  %168 = vmatprep.subr.mxu0 0.0
  %169 = vmatpush2.msra.mxu0 0.0
  %170 = vmatprep.subr.mxu0 0.0
  %171 = vmatpush2.msra.mxu0 0.0
  %172 = vmatprep.subr.mxu0 0.0
  %173 = vmatpush2.msra.mxu0 0.0
  %174 = vmatprep.subr.mxu0 0.0
  %175 = vmatpush2.msra.mxu0 0.0
  %176 = vmatprep.subr.mxu0 0.0
  %177 = vmatpush2.msra.mxu0 0.0
  %178 = vmatprep.subr.mxu0 0.0
  %179 = vmatpush2.msra.mxu0 0.0
  %180 = vmatprep.subr.mxu0 0.0
  %181 = vmatpush2.msra.mxu0 0.0
  %182 = vmatprep.subr.mxu0 0.0
  %183 = vmatpush2.msra.mxu0 0.0
  %184 = vmatprep.subr.mxu0 0.0
  %185 = vmatpush2.msra.mxu0 0.0
  %186 = vmatprep.subr.mxu0 0.0
  %187 = vmatpush2.msra.mxu0 0.0
  %188 = vmatprep.subr.mxu0 0.0
  %189 = vmatpush2.msra.mxu0 0.0
  %190 = vmatprep.subr.mxu0 0.0
  %191 = vmatpush2.msra.mxu0 0.0
  %192 = vmatprep.subr.mxu0 0.0
  %193 = vmatpush2.msra.mxu0 0.0
  %194 = vmatprep.mubr.f32.mxu0 0.0
  %195 = vmatmul.mubr.f32.gmra.mxu0 %v128
  %v196 = vpop.f32.mrf.mxu0
  %v197 = vadd.f32 %v124, %v196
  %v198 = vpop.f32.mrf.mxu0
  %199 = vdwg.mxu0
  %v200 = vmax.f32 %v197, 0.0
  %v201 = vld [vmem:[%s5] sm:$0xff]
  %v202 = vld [vmem:[%s5 + $0x8] sm:$0xff]
  %v203 = vld [vmem:[%s5 + $0x10] sm:$0xff]
  %v204 = vld [vmem:[%s5 + $0x18] sm:$0xff]
  %v205 = vld [vmem:[%s5 + $0x20] sm:$0xff]
  %v206 = vld [vmem:[%s5 + $0x28] sm:$0xff]
  %v207 = vld [vmem:[%s5 + $0x30] sm:$0xff]
  %v208 = vld [vmem:[%s5 + $0x38] sm:$0xff]
  %v209 = vld [vmem:[%s6] sm:$0x1]
  %v211 = vlaneseq
  %v212 = vshrl.u32 %v211, 7
  %v213 = vsub.s32 0, %v212
  %v214 = vrot.slane %v209, %v213
  %v217 = vsel %vm126, %v200, 0
  %219 = vmatprep.subr.mxu0 0.0
  %220 = vmatpush1.msra.mxu0 0.0
  %221 = vmatprep.subr.mxu0 0.0
  %222 = vmatpush1.msra.mxu0 0.0
  %223 = vmatprep.subr.mxu0 0.0
  %224 = vmatpush1.msra.mxu0 0.0
  %225 = vmatprep.subr.mxu0 0.0
  %226 = vmatpush1.msra.mxu0 0.0
  %227 = vmatprep.subr.mxu0 0.0
  %228 = vmatpush1.msra.mxu0 0.0
  %229 = vmatprep.subr.mxu0 0.0
  %230 = vmatpush1.msra.mxu0 0.0
  %231 = vmatprep.subr.mxu0 0.0
  %232 = vmatpush1.msra.mxu0 0.0
  %233 = vmatprep.subr.mxu0 0.0
  %234 = vmatpush1.msra.mxu0 0.0
  %235 = vmatprep.subr.mxu0 0.0
  %236 = vmatpush1.msra.mxu0 %v208
  %237 = vmatprep.subr.mxu0 0.0
  %238 = vmatpush1.msra.mxu0 %v207
  %239 = vmatprep.subr.mxu0 0.0
  %240 = vmatpush1.msra.mxu0 %v206
  %241 = vmatprep.subr.mxu0 0.0
  %242 = vmatpush1.msra.mxu0 %v205
  %243 = vmatprep.subr.mxu0 0.0
  %244 = vmatpush1.msra.mxu0 %v204
  %245 = vmatprep.subr.mxu0 0.0
  %246 = vmatpush1.msra.mxu0 %v203
  %247 = vmatprep.subr.mxu0 0.0
  %248 = vmatpush1.msra.mxu0 %v202
  %249 = vmatprep.subr.mxu0 0.0
  %250 = vmatpush1.msra.mxu0 %v201
  %251 = vmatprep.subr.mxu0 0.0
  %252 = vmatpush2.msra.mxu0 0.0
  %253 = vmatprep.subr.mxu0 0.0
  %254 = vmatpush2.msra.mxu0 0.0
  %255 = vmatprep.subr.mxu0 0.0
  %256 = vmatpush2.msra.mxu0 0.0
  %257 = vmatprep.subr.mxu0 0.0
  %258 = vmatpush2.msra.mxu0 0.0
  %259 = vmatprep.subr.mxu0 0.0
  %260 = vmatpush2.msra.mxu0 0.0
  %261 = vmatprep.subr.mxu0 0.0
  %262 = vmatpush2.msra.mxu0 0.0
  %263 = vmatprep.subr.mxu0 0.0
  %264 = vmatpush2.msra.mxu0 0.0
  %265 = vmatprep.subr.mxu0 0.0
  %266 = vmatpush2.msra.mxu0 0.0
  %267 = vmatprep.subr.mxu0 0.0
  %268 = vmatpush2.msra.mxu0 0.0
  %269 = vmatprep.subr.mxu0 0.0
  %270 = vmatpush2.msra.mxu0 0.0
  %271 = vmatprep.subr.mxu0 0.0
  %272 = vmatpush2.msra.mxu0 0.0
  %273 = vmatprep.subr.mxu0 0.0
  %274 = vmatpush2.msra.mxu0 0.0
  %275 = vmatprep.subr.mxu0 0.0
  %276 = vmatpush2.msra.mxu0 0.0
  %277 = vmatprep.subr.mxu0 0.0
  %278 = vmatpush2.msra.mxu0 0.0
  %279 = vmatprep.subr.mxu0 0.0
  %280 = vmatpush2.msra.mxu0 0.0
  %281 = vmatprep.subr.mxu0 0.0
  %282 = vmatpush2.msra.mxu0 0.0
  %283 = vmatprep.mubr.f32.mxu0 0.0
  %284 = vmatmul.mubr.f32.gmra.mxu0 %v217
  %v285 = vpop.f32.mrf.mxu0
  %v286 = vadd.f32 %v214, %v285
  %v287 = vpop.f32.mrf.mxu0
  %288 = vdwg.mxu0
  %289 = vst [vmem:[%s7] sm:$0xff] %v286
  // Predicated region
  $region30: #{dqn_forward.1} parent=0 // pred_check
    _
  $region31: #{dqn_forward.1} parent=0 // pred_check_branch
    %291 = sbr.rel (0) target = $region33
  $region32: #{dqn_forward.1} parent=0 // pred_region
    _
  $region33: #{dqn_forward.1} parent=0 // pred_fallthru
    _
  // Predicated region
  $region34: #{dqn_forward.1} parent=0 // pred_check
    _
  $region35: #{dqn_forward.1} parent=0 // pred_check_branch
    %293 = sbr.rel (0) target = $region37
  $region36: #{dqn_forward.1} parent=0 // pred_region
    _
  $region37: #{dqn_forward.1} parent=0 // pred_fallthru
    _

</llo_original>
